<compile_context>
chip_gen: v5e
topology: v5e:2x2
jax: 0.10.0
libtpu: 0.0.40
codegen_flags: <defaults>
</compile_context>

<pallas_src>
import functools

import jax
import jax.numpy as jnp
import numpy as np
from jax import lax
from jax.experimental import pallas as pl
from jax.experimental.pallas import tpu as pltpu

EPS = 1e-6


def _mixstyle_kernel(lmda_ref, perm_ref, x_ref, o_ref, *, true_hw, batch):
    """One channel-slab block (all batch rows resident) per grid step.

    lmda_ref : VMEM (B, 1, 1) f32   Beta(alpha, alpha) samples
    perm_ref : VMEM (B, 1, 1) i32   batch permutation
    x_ref    : VMEM (B, Ct, HW)     input channel slab
    o_ref    : VMEM (B, Ct, HW)     output channel slab
    """
    x = x_ref[...].astype(jnp.float32)                     # (B, Ct, HW)

    inv_n = jnp.float32(1.0 / true_hw)
    inv_nm1 = jnp.float32(1.0 / (true_hw - 1))             # torch.var is unbiased
    n_f = jnp.float32(true_hw)

    # Per-(sample, channel) statistics over the spatial lanes (XLU reductions).
    mu = jnp.sum(x, axis=-1, keepdims=True) * inv_n        # (B, Ct, 1)
    sumsq = jnp.sum(x * x, axis=-1, keepdims=True)         # (B, Ct, 1)
    # Single-pass unbiased variance; clamp tiny negative values from f32
    # cancellation (activations with very large means may want the centered
    # two-pass form instead -- see notes).
    var = jnp.maximum((sumsq - n_f * mu * mu) * inv_nm1, 0.0)

    # Tiny (B, Ct, 1) operands: sqrt / rsqrt run on the EUP, effectively free.
    sig = jnp.sqrt(var + EPS)
    inv_sig = lax.rsqrt(var + EPS)

    # Gather the permuted per-(b, c) stats in-VMEM: mu2[b] = mu[perm[b]].
    # perm is a batch permutation, so a static unrolled select-loop over the
    # (small, static) batch suffices -- no second streamed x[perm[b]] tile.
    perm_v = perm_ref[...]                                  # (B, 1, 1) int32
    lm = lmda_ref[...]                                      # (B, 1, 1) f32

    mu2 = jnp.zeros_like(mu)
    sig2 = jnp.zeros_like(sig)
    for j in range(batch):                                  # static unroll, tiny data
        cond = perm_v == j                                  # (B, 1, 1) bool
        mu2 = jnp.where(cond, mu[j], mu2)                   # mu[j]: (Ct, 1), broadcast
        sig2 = jnp.where(cond, sig[j], sig2)

    mu_mix = mu * lm + mu2 * (1.0 - lm)
    sig_mix = sig * lm + sig2 * (1.0 - lm)

    # Per-channel affine: y = (x - mu)/sig * sig_mix + mu_mix == x*scale + shift
    scale = sig_mix * inv_sig                               # (B, Ct, 1)
    shift = mu_mix - mu * scale
    o_ref[...] = (x * scale + shift).astype(o_ref.dtype)


def _pick_c_tile(C, B, HW, itemsize, vmem_budget_bytes):
    """Largest channel tile whose pipelined block footprint fits the budget.

    Footprint per channel: double-buffered input + output at the I/O dtype
    (4 * itemsize) plus ~2 live f32 temporaries inside the body (2 * 4).
    Legal tiles: multiples of the sublane packing (32 // itemsize: 8 f32,
    16 bf16, 32 i8) with a cdiv grid, or the full channel extent.
    """
    sub = max(1, 32 // itemsize)
    per_chan = B * HW * (4 * itemsize + 2 * 4)
    max_ct = max(1, vmem_budget_bytes // per_chan)

    divisors = [d for d in range(sub, C, sub) if C % d == 0]
    cands = sorted(set(divisors + [C]))
    fitting = [d for d in cands if d <= max_ct]
    if fitting:
        ct = fitting[-1]
    else:
        # No exact divisor fits: cdiv grid with the largest sublane multiple
        # under budget (Pallas masks the partial edge block).
        ct = min(C, max(sub, (max_ct // sub) * sub))

    # Prefer >= 2 channel blocks: feeds both v7x TensorCores and lets the
    # pipeline overlap DMA with compute even when everything fits in one slab.
    if ct == C and C >= 2 * sub:
        half = (C + 1) // 2
        half_cands = [d for d in cands if d <= half]
        if half_cands:
            ct = half_cands[-1]
        else:
            ct = min(C, -(-half // sub) * sub)
    return ct


def _vmem_budget_bytes():
    """~75% of physical VMEM: ~96 MiB on v5e/v6e (128 MiB), ~48 MiB on v7x (64 MiB)."""
    phys = 64 * 1024 * 1024
    try:
        info = pltpu.get_tpu_info()
        phys = int(getattr(info, "vmem_capacity_bytes", phys))
    except Exception:
        pass
    return int(phys * 0.75)


def mixstyle_pallas(x, lmda, perm, *, vmem_limit_bytes=None):
    """x: (B, C, H, W); lmda: (B,) float32; perm: (B,) int32 permutation."""
    B, C, H, W = x.shape
    HW = H * W
    assert HW > 1, "unbiased variance needs H*W > 1"

    # Flatten spatial dims only -- no padding, no post-kernel slice.  The
    # spatial block dim is the full HW (full-extent last dim is always legal);
    # a partial trailing 128-lane vreg just uses a masked store.
    xr = x.reshape(B, C, HW)

    if vmem_limit_bytes is None:
        vmem_limit_bytes = _vmem_budget_bytes()

    itemsize = jnp.dtype(x.dtype).itemsize
    c_tile = _pick_c_tile(C, B, HW, itemsize, vmem_limit_bytes)
    n_ct = pl.cdiv(C, c_tile)

    lmda3 = lmda.astype(jnp.float32).reshape(B, 1, 1)
    perm3 = perm.astype(jnp.int32).reshape(B, 1, 1)

    kernel = functools.partial(_mixstyle_kernel, true_hw=HW, batch=B)

    elems = B * C * HW
    cost = pl.CostEstimate(
        flops=int(7 * elems),                 # sum, sumsq (mul+add), apply (mul+add), ...
        transcendentals=int(2 * B * C),       # sqrt + rsqrt per (b, c)
        bytes_accessed=int(2 * elems * itemsize),  # read x once, write out once
    )

    out = pl.pallas_call(
        kernel,
        out_shape=jax.ShapeDtypeStruct((B, C, HW), x.dtype),
        grid_spec=pltpu.PrefetchScalarGridSpec(
            num_scalar_prefetch=0,
            grid=(n_ct,),
            in_specs=[
                pl.BlockSpec((B, 1, 1), lambda c: (0, 0, 0)),        # lmda
                pl.BlockSpec((B, 1, 1), lambda c: (0, 0, 0)),        # perm
                pl.BlockSpec((B, c_tile, HW), lambda c: (0, c, 0)),  # x slab
            ],
            out_specs=pl.BlockSpec((B, c_tile, HW), lambda c: (0, c, 0)),
        ),
        compiler_params=pltpu.CompilerParams(
            dimension_semantics=("parallel",),
            vmem_limit_bytes=int(vmem_limit_bytes),
        ),
        cost_estimate=cost,
    )(lmda3, perm3, xr)

    return out.reshape(B, C, H, W)


def mixstyle_ref(x, lmda, perm):
    """Pure-JAX reference mirroring the PyTorch forward."""
    mu = jnp.mean(x, axis=(2, 3), keepdims=True)
    var = jnp.var(x, axis=(2, 3), keepdims=True, ddof=1)  # unbiased, as torch.var
    sig = jnp.sqrt(var + EPS)
    x_normed = (x - mu) / sig
    lm = lmda.reshape(-1, 1, 1, 1)
    mu2, sig2 = mu[perm], sig[perm]
    mu_mix = mu * lm + mu2 * (1.0 - lm)
    sig_mix = sig * lm + sig2 * (1.0 - lm)
    return x_normed * sig_mix + mu_mix


if __name__ == "__main__":
    key = jax.random.PRNGKey(0)
    k_x, k_lm, k_perm, k_p, k_x2 = jax.random.split(key, 5)

    B, C, H, W = 2, 4, 16, 16
    p, alpha = 0.5, 0.1

    x = jax.random.normal(k_x, (B, C, H, W), dtype=jnp.float32)

    # TODO(synk): `random.random() > self.p` / training / _activated gating is
    # host-side control flow, kept outside the kernel (identity path returns x).
    apply_mixstyle = bool(jax.random.uniform(k_p, ()) <= p)

    # lmda ~ Beta(alpha, alpha), perm ~ randperm(B)   (mix == 'random')
    lmda = jax.random.beta(k_lm, alpha, alpha, shape=(B,)).astype(jnp.float32)
    perm = jax.random.permutation(k_perm, B).astype(jnp.int32)

    # Always exercise the kernel so the script validates it regardless of the
    # host-side probability gate.
    out = jax.block_until_ready(mixstyle_pallas(x, lmda, perm))
    ref = mixstyle_ref(x, lmda, perm)
    np.testing.assert_allclose(np.asarray(out), np.asarray(ref), rtol=1e-5, atol=1e-5)

    # Second case: H*W = 49 (not a multiple of 128) exercises the unpadded
    # full-extent spatial block with masked partial-lane stores.
    x2 = jax.random.normal(k_x2, (B, C, 7, 7), dtype=jnp.float32)
    out2 = jax.block_until_ready(mixstyle_pallas(x2, lmda, perm))
    ref2 = mixstyle_ref(x2, lmda, perm)
    np.testing.assert_allclose(np.asarray(out2), np.asarray(ref2), rtol=1e-5, atol=1e-5)

    print("KERNEL_OK")
</pallas_src>

<mosaic_0001>
module attributes {stable_mosaic.version = 11 : i64} {
  func.func @_mixstyle_kernel(%arg0: i32, %arg1: memref<2x1x1xf32, #tpu.memory_space<vmem>>, %arg2: memref<2x1x1xi32, #tpu.memory_space<vmem>>, %arg3: memref<2x4x256xf32, #tpu.memory_space<vmem>>, %arg4: memref<2x4x256xf32, #tpu.memory_space<vmem>>) attributes {dimension_semantics = [#tpu.dimension_semantics<parallel>], iteration_bounds = array<i64: 1>, scalar_prefetch = 0 : i64, scratch_operands = 0 : i64, tpu.core_type = #tpu.core_type<tc>, window_params = [{pipeline_mode = #tpu.pipeline_mode<synchronous>, transform_indices = @transform_0, window_bounds = array<i64: 2, 1, 1>}, {pipeline_mode = #tpu.pipeline_mode<synchronous>, transform_indices = @transform_1, window_bounds = array<i64: 2, 1, 1>}, {transform_indices = @transform_2, window_bounds = array<i64: 2, 4, 256>}, {transform_indices = @transform_3, window_bounds = array<i64: 2, 4, 256>}]} {
    %c0 = arith.constant 0 : index
    %c0_0 = arith.constant 0 : index
    %c0_1 = arith.constant 0 : index
    %0 = vector.load %arg3[%c0, %c0_0, %c0_1] : memref<2x4x256xf32, #tpu.memory_space<vmem>>, vector<2x4x256xf32>
    %cst = arith.constant dense<0.000000e+00> : vector<2x4xf32>
    %1 = vector.multi_reduction <add>, %0, %cst [2] : vector<2x4x256xf32> to vector<2x4xf32>
    %2 = vector.shape_cast %1 : vector<2x4xf32> to vector<2x4x1xf32>
    %cst_2 = arith.constant 3.906250e-03 : f32
    %3 = vector.broadcast %cst_2 : f32 to vector<2x4x1xf32>
    %4 = arith.mulf %2, %3 : vector<2x4x1xf32>
    %5 = arith.mulf %0, %0 : vector<2x4x256xf32>
    %cst_3 = arith.constant dense<0.000000e+00> : vector<2x4xf32>
    %6 = vector.multi_reduction <add>, %5, %cst_3 [2] : vector<2x4x256xf32> to vector<2x4xf32>
    %7 = vector.shape_cast %6 : vector<2x4xf32> to vector<2x4x1xf32>
    %cst_4 = arith.constant 2.560000e+02 : f32
    %8 = vector.broadcast %cst_4 : f32 to vector<2x4x1xf32>
    %9 = arith.mulf %8, %4 : vector<2x4x1xf32>
    %10 = arith.mulf %9, %4 : vector<2x4x1xf32>
    %11 = arith.subf %7, %10 : vector<2x4x1xf32>
    %cst_5 = arith.constant 0.00392156886 : f32
    %12 = vector.broadcast %cst_5 : f32 to vector<2x4x1xf32>
    %13 = arith.mulf %11, %12 : vector<2x4x1xf32>
    %cst_6 = arith.constant 0.000000e+00 : f32
    %14 = vector.broadcast %cst_6 : f32 to vector<2x4x1xf32>
    %15 = arith.maximumf %13, %14 : vector<2x4x1xf32>
    %cst_7 = arith.constant 9.99999997E-7 : f32
    %16 = vector.broadcast %cst_7 : f32 to vector<2x4x1xf32>
    %17 = arith.addf %15, %16 : vector<2x4x1xf32>
    %18 = math.sqrt %17 : vector<2x4x1xf32>
    %cst_8 = arith.constant 9.99999997E-7 : f32
    %19 = vector.broadcast %cst_8 : f32 to vector<2x4x1xf32>
    %20 = arith.addf %15, %19 : vector<2x4x1xf32>
    %21 = math.rsqrt %20 : vector<2x4x1xf32>
    %c0_9 = arith.constant 0 : index
    %c0_10 = arith.constant 0 : index
    %c0_11 = arith.constant 0 : index
    %22 = vector.load %arg2[%c0_9, %c0_10, %c0_11] : memref<2x1x1xi32, #tpu.memory_space<vmem>>, vector<2x1x1xi32>
    %c0_12 = arith.constant 0 : index
    %c0_13 = arith.constant 0 : index
    %c0_14 = arith.constant 0 : index
    %23 = vector.load %arg1[%c0_12, %c0_13, %c0_14] : memref<2x1x1xf32, #tpu.memory_space<vmem>>, vector<2x1x1xf32>
    %cst_15 = arith.constant 0.000000e+00 : f32
    %24 = vector.broadcast %cst_15 : f32 to vector<2x4x1xf32>
    %cst_16 = arith.constant 0.000000e+00 : f32
    %25 = vector.broadcast %cst_16 : f32 to vector<2x4x1xf32>
    %c0_i32 = arith.constant 0 : i32
    %26 = vector.broadcast %c0_i32 : i32 to vector<2x1x1xi32>
    %27 = arith.cmpi eq, %22, %26 : vector<2x1x1xi32>
    %28 = vector.extract_strided_slice %4 {offsets = [0, 0, 0], sizes = [1, 4, 1], strides = [1, 1, 1]} : vector<2x4x1xf32> to vector<1x4x1xf32>
    %29 = vector.shape_cast %28 : vector<1x4x1xf32> to vector<4x1xf32>
    %30 = vector.shape_cast %27 : vector<2x1x1xi1> to vector<2x1x1xi1>
    %31 = vector.broadcast %30 : vector<2x1x1xi1> to vector<2x4x1xi1>
    %32 = vector.shape_cast %29 : vector<4x1xf32> to vector<1x4x1xf32>
    %33 = vector.broadcast %32 : vector<1x4x1xf32> to vector<2x4x1xf32>
    %34 = arith.select %31, %33, %24 : vector<2x4x1xi1>, vector<2x4x1xf32>
    %35 = vector.extract_strided_slice %18 {offsets = [0, 0, 0], sizes = [1, 4, 1], strides = [1, 1, 1]} : vector<2x4x1xf32> to vector<1x4x1xf32>
    %36 = vector.shape_cast %35 : vector<1x4x1xf32> to vector<4x1xf32>
    %37 = vector.shape_cast %27 : vector<2x1x1xi1> to vector<2x1x1xi1>
    %38 = vector.broadcast %37 : vector<2x1x1xi1> to vector<2x4x1xi1>
    %39 = vector.shape_cast %36 : vector<4x1xf32> to vector<1x4x1xf32>
    %40 = vector.broadcast %39 : vector<1x4x1xf32> to vector<2x4x1xf32>
    %41 = arith.select %38, %40, %25 : vector<2x4x1xi1>, vector<2x4x1xf32>
    %c1_i32 = arith.constant 1 : i32
    %42 = vector.broadcast %c1_i32 : i32 to vector<2x1x1xi32>
    %43 = arith.cmpi eq, %22, %42 : vector<2x1x1xi32>
    %44 = vector.extract_strided_slice %4 {offsets = [1, 0, 0], sizes = [1, 4, 1], strides = [1, 1, 1]} : vector<2x4x1xf32> to vector<1x4x1xf32>
    %45 = vector.shape_cast %44 : vector<1x4x1xf32> to vector<4x1xf32>
    %46 = vector.shape_cast %43 : vector<2x1x1xi1> to vector<2x1x1xi1>
    %47 = vector.broadcast %46 : vector<2x1x1xi1> to vector<2x4x1xi1>
    %48 = vector.shape_cast %45 : vector<4x1xf32> to vector<1x4x1xf32>
    %49 = vector.broadcast %48 : vector<1x4x1xf32> to vector<2x4x1xf32>
    %50 = arith.select %47, %49, %34 : vector<2x4x1xi1>, vector<2x4x1xf32>
    %51 = vector.extract_strided_slice %18 {offsets = [1, 0, 0], sizes = [1, 4, 1], strides = [1, 1, 1]} : vector<2x4x1xf32> to vector<1x4x1xf32>
    %52 = vector.shape_cast %51 : vector<1x4x1xf32> to vector<4x1xf32>
    %53 = vector.shape_cast %43 : vector<2x1x1xi1> to vector<2x1x1xi1>
    %54 = vector.broadcast %53 : vector<2x1x1xi1> to vector<2x4x1xi1>
    %55 = vector.shape_cast %52 : vector<4x1xf32> to vector<1x4x1xf32>
    %56 = vector.broadcast %55 : vector<1x4x1xf32> to vector<2x4x1xf32>
    %57 = arith.select %54, %56, %41 : vector<2x4x1xi1>, vector<2x4x1xf32>
    %58 = vector.broadcast %23 : vector<2x1x1xf32> to vector<2x4x1xf32>
    %59 = arith.mulf %4, %58 : vector<2x4x1xf32>
    %cst_17 = arith.constant 1.000000e+00 : f32
    %60 = vector.broadcast %cst_17 : f32 to vector<2x1x1xf32>
    %61 = arith.subf %60, %23 : vector<2x1x1xf32>
    %62 = vector.broadcast %61 : vector<2x1x1xf32> to vector<2x4x1xf32>
    %63 = arith.mulf %50, %62 : vector<2x4x1xf32>
    %64 = arith.addf %59, %63 : vector<2x4x1xf32>
    %65 = vector.broadcast %23 : vector<2x1x1xf32> to vector<2x4x1xf32>
    %66 = arith.mulf %18, %65 : vector<2x4x1xf32>
    %cst_18 = arith.constant 1.000000e+00 : f32
    %67 = vector.broadcast %cst_18 : f32 to vector<2x1x1xf32>
    %68 = arith.subf %67, %23 : vector<2x1x1xf32>
    %69 = vector.broadcast %68 : vector<2x1x1xf32> to vector<2x4x1xf32>
    %70 = arith.mulf %57, %69 : vector<2x4x1xf32>
    %71 = arith.addf %66, %70 : vector<2x4x1xf32>
    %72 = arith.mulf %71, %21 : vector<2x4x1xf32>
    %73 = arith.mulf %4, %72 : vector<2x4x1xf32>
    %74 = arith.subf %64, %73 : vector<2x4x1xf32>
    %75 = vector.broadcast %72 : vector<2x4x1xf32> to vector<2x4x256xf32>
    %76 = arith.mulf %0, %75 : vector<2x4x256xf32>
    %77 = vector.broadcast %74 : vector<2x4x1xf32> to vector<2x4x256xf32>
    %78 = arith.addf %76, %77 : vector<2x4x256xf32>
    %c0_19 = arith.constant 0 : index
    %c0_20 = arith.constant 0 : index
    %c0_21 = arith.constant 0 : index
    %79 = vector.load %arg4[%c0_19, %c0_20, %c0_21] : memref<2x4x256xf32, #tpu.memory_space<vmem>>, vector<2x4x256xf32>
    tpu.vector_store %arg4[%c0_19, %c0_20, %c0_21], %78 {strides = array<i32>} : memref<2x4x256xf32, #tpu.memory_space<vmem>>, vector<2x4x256xf32>,
    return
  }
  func.func @transform_0(%arg0: i32) -> (i32, i32, i32) {
    %c0_i32 = arith.constant 0 : i32
    %c0_i32_0 = arith.constant 0 : i32
    %c0_i32_1 = arith.constant 0 : i32
    %c0_i32_2 = arith.constant 0 : i32
    return %c0_i32, %c0_i32_0, %c0_i32_1 : i32, i32, i32
  }
  func.func @transform_1(%arg0: i32) -> (i32, i32, i32) {
    %c0_i32 = arith.constant 0 : i32
    %c0_i32_0 = arith.constant 0 : i32
    %c0_i32_1 = arith.constant 0 : i32
    %c0_i32_2 = arith.constant 0 : i32
    return %c0_i32, %c0_i32_0, %c0_i32_1 : i32, i32, i32
  }
  func.func @transform_2(%arg0: i32) -> (i32, i32, i32) {
    %c0_i32 = arith.constant 0 : i32
    %c0_i32_0 = arith.constant 0 : i32
    %c0_i32_1 = arith.constant 0 : i32
    return %c0_i32, %arg0, %c0_i32_0 : i32, i32, i32
  }
  func.func @transform_3(%arg0: i32) -> (i32, i32, i32) {
    %c0_i32 = arith.constant 0 : i32
    %c0_i32_0 = arith.constant 0 : i32
    %c0_i32_1 = arith.constant 0 : i32
    return %c0_i32, %arg0, %c0_i32_0 : i32, i32, i32
  }
}

</mosaic_0001>

<llo_original>
// kernel: tpu_custom_call.1
$region0: #{tpu_custom_call.1}
  #allocation0 [shape = 'u32[]', space=smem, size = 0x4, offset = 0x4, fixed_abs, tag = 'smem constant byte address 0x4 - core index']
  #allocation1 [shape = 'u32[72,128]{1,0:T(1,128)}', space=vmem, size = 0x9000, scoped, tag = 'internal scratch']
  %s0 = inlined_call_operand.vmem [shape: f32[2,1,1], index: 0, kind: input, shape index: {}]
  %s1 = inlined_call_operand.vmem [shape: s32[2,1,1], index: 1, kind: input, shape index: {}]
  %s2 = inlined_call_operand.hbm [shape: f32[2,4,256], index: 2, kind: input, shape index: {}]
  %s3 = inlined_call_operand.hbm [shape: f32[2,4,256], index: 3, kind: output, shape index: {}]
  %s4 = sld [smem:[#allocation0]]
  $region26: #{tpu_custom_call.1} parent=0
    _
  %s6 = ssub.s32 1, %s4
  %s7 = scalar_select 0, %s6, %s4
  $region1: #{tpu_custom_call.1} parent=0
    #allocation2 [shape = 'u8[8192]{0}', space=vmem, size = 0x2000, scoped, tag = 'input window, operand 2, single buffered']
    #allocation3 [shape = 's32[1]{0}', space=sflag, size = 0x4, scoped, tag = 'scoped memory for tpu_custom_call.1']
    #allocation4 [shape = 's32[1]{0}', space=sflag, size = 0x4, scoped, tag = 'scoped memory for tpu_custom_call.1']
    #allocation5 [shape = 'u8[8192]{0}', space=vmem, size = 0x2000, scoped, tag = 'output window, operand 0, single buffered']
    %8 = vsyncpa [#allocation3], 0
    %9 = vsyncpa [#allocation4], 0
    // Predicated region
    $region2: #{tpu_custom_call.1} parent=1 // pred_check
      _
    $region3: #{tpu_custom_call.1} parent=1 // pred_check_branch
      %11 = sbr.rel (0) target = $region5
    $region4: #{tpu_custom_call.1} parent=1 // pred_region
      _
    $region5: #{tpu_custom_call.1} parent=1 // pred_fallthru
      _
    // Predicated region
    $region6: #{tpu_custom_call.1} parent=1 // pred_check
      _
    $region7: #{tpu_custom_call.1} parent=1 // pred_check_branch
      %13 = sbr.rel (0) target = $region9
    $region8: #{tpu_custom_call.1} parent=1 // pred_region
      _
    $region9: #{tpu_custom_call.1} parent=1 // pred_fallthru
      _
    // Predicated region
    $region10: #{tpu_custom_call.1} parent=1 // pred_check
      _
    $region11: #{tpu_custom_call.1} parent=1 // pred_check_branch
      %15 = sbr.rel (0) target = $region13
    $region12: #{tpu_custom_call.1} parent=1 // pred_region
      %17 = vsyncadd [#allocation3], 0
      %s18 = sshll.u32 %s2, 4
      %s19 = int_to_ptr.hbm [resolvable:$true] %s18
      %s20 = sshll.u32 [#allocation2], 4
      %s21 = int_to_ptr.vmem [resolvable:$true] %s20
      %26 = dma.hbm_to_vmem [thread:$0]  %s19, 256, %s21, [#allocation3], 128, 128, 8
    $region13: #{tpu_custom_call.1} parent=1 // pred_fallthru
      _
    // Predicated region
    $region14: #{tpu_custom_call.1} parent=1 // pred_check
      _
    $region15: #{tpu_custom_call.1} parent=1 // pred_check_branch
      %28 = sbr.rel (0) target = $region17
    $region16: #{tpu_custom_call.1} parent=1 // pred_region
      %30 = dma.done [#allocation3], 256
    $region17: #{tpu_custom_call.1} parent=1 // pred_fallthru
      _
    %v31 = vld [vmem:[#allocation2] sm:$0xff]
    %v32 = vld [vmem:[#allocation2 + $0x8] sm:$0xff]
    %35 = vst [vmem:[#allocation1] ss:$2 sm:$0xff] %v31
    %v36 = vld.sshfl [vmem:[#allocation1] sm:$0xff pattern:$0x75316420]
    %v37 = vld.sshfl [vmem:[#allocation1 + $0x8] sm:$0xff pattern:$0x75316420]
    %s38 = scalar_lea.vmem [#allocation1], 16
    %39 = vst [vmem:[%s38] ss:$2 sm:$0xff] %v32
    %v40 = vld.sshfl [vmem:[#allocation1 + $0x10] sm:$0xff pattern:$0x75316420]
    %v41 = vld.sshfl [vmem:[#allocation1 + $0x18] sm:$0xff pattern:$0x75316420]
    %vm46 = vcmask 1043456
    %v47 = vsel %vm46, %v36, 0.0
    %v48 = vsel %vm46, %v37, 0.0
    %v49 = vadd.f32 %v47, %v48
    %50 = vadd.xlane.f32.xlu0 %v49
    %v51 = vpop.xlane.xlu0 %50
    %v52 = vsel %vm46, %v40, 0.0
    %v53 = vsel %vm46, %v41, 0.0
    %v54 = vadd.f32 %v52, %v53
    %55 = vadd.xlane.f32.xlu0 %v54
    %v56 = vpop.xlane.xlu0 %55
    %v57 = vmul.f32 %v51, 0.00390625
    %v58 = vmul.f32 %v56, 0.00390625
    %v59 = vmul.f32 %v31, %v31
    %v60 = vmul.f32 %v32, %v32
    %63 = vst [vmem:[#allocation1] ss:$2 sm:$0xff] %v59
    %v64 = vld.sshfl [vmem:[#allocation1] sm:$0xff pattern:$0x75316420]
    %v65 = vld.sshfl [vmem:[#allocation1 + $0x8] sm:$0xff pattern:$0x75316420]
    %s66 = scalar_lea.vmem [#allocation1], 16
    %67 = vst [vmem:[%s66] ss:$2 sm:$0xff] %v60
    %v68 = vld.sshfl [vmem:[#allocation1 + $0x10] sm:$0xff pattern:$0x75316420]
    %v69 = vld.sshfl [vmem:[#allocation1 + $0x18] sm:$0xff pattern:$0x75316420]
    %v74 = vsel %vm46, %v64, 0.0
    %v75 = vsel %vm46, %v65, 0.0
    %v76 = vadd.f32 %v74, %v75
    %77 = vadd.xlane.f32.xlu0 %v76
    %v78 = vpop.xlane.xlu0 %77
    %v79 = vsel %vm46, %v68, 0.0
    %v80 = vsel %vm46, %v69, 0.0
    %v81 = vadd.f32 %v79, %v80
    %82 = vadd.xlane.f32.xlu0 %v81
    %v83 = vpop.xlane.xlu0 %82
    %v84 = vmul.f32 %v57, 256.0
    %v85 = vmul.f32 %v58, 256.0
    %v86 = vmul.f32 %v84, %v57
    %v87 = vmul.f32 %v85, %v58
    %v88 = vsub.f32 %v78, %v86
    %v89 = vsub.f32 %v83, %v87
    %v90 = vmul.f32 %v88, 0.003921569
    %v91 = vmul.f32 %v89, 0.003921569
    %v92 = vmax.f32 %v90, 0.0
    %v93 = vmax.f32 %v91, 0.0
    %v94 = vadd.f32 %v92, 1e-06
    %v95 = vadd.f32 %v93, 1e-06
    %v96 = vrsqrt.pop %v94
    %v97 = vmul.f32 %v96, %v94
    %v98 = vmul.f32 %v97, %v96
    %v99 = vmul.f32 0.5, %v98
    %v100 = vsub.f32 1.5, %v99
    %v101 = vmul.f32 %v96, %v100
    %v102 = vmul.f32 %v94, %v101
    %vm103 = vcmp.eq.f32.partialorder %v94, inf
    %v104 = vsel %vm103, %v94, %v102
    %vm105 = vcmp.eq.f32.partialorder %v94, 0.0
    %v106 = vand.u32 %v94, 2147483648
    %v107 = vsel %vm105, %v106, %v104
    %v108 = vrsqrt.pop %v95
    %v109 = vmul.f32 %v108, %v95
    %v110 = vmul.f32 %v109, %v108
    %v111 = vmul.f32 0.5, %v110
    %v112 = vsub.f32 1.5, %v111
    %v113 = vmul.f32 %v108, %v112
    %v114 = vmul.f32 %v95, %v113
    %vm115 = vcmp.eq.f32.partialorder %v95, inf
    %v116 = vsel %vm115, %v95, %v114
    %vm117 = vcmp.eq.f32.partialorder %v95, 0.0
    %v118 = vand.u32 %v95, 2147483648
    %v119 = vsel %vm117, %v118, %v116
    %v120 = vrsqrt.pop %v94
    %v121 = vmul.f32 %v120, %v94
    %v122 = vmul.f32 %v121, %v120
    %v123 = vmul.f32 0.5, %v122
    %v124 = vsub.f32 1.5, %v123
    %v125 = vmul.f32 %v120, %v124
    %vm126 = vweird.f32 %v94
    %vm127 = vweird.f32 %v120
    %vm128 = vmor %vm126, %vm127
    %v129 = vsel %vm128, %v120, %v125
    %v130 = vrsqrt.pop %v95
    %v131 = vmul.f32 %v130, %v95
    %v132 = vmul.f32 %v131, %v130
    %v133 = vmul.f32 0.5, %v132
    %v134 = vsub.f32 1.5, %v133
    %v135 = vmul.f32 %v130, %v134
    %vm136 = vweird.f32 %v95
    %vm137 = vweird.f32 %v130
    %vm138 = vmor %vm136, %vm137
    %v139 = vsel %vm138, %v130, %v135
    %v140 = vld [vmem:[%s1] sm:$0x1]
    %v141 = vld [vmem:[%s1 + $0x1] sm:$0x1]
    %v142 = vld [vmem:[%s0] sm:$0x1]
    %v143 = vld [vmem:[%s0 + $0x1] sm:$0x1]
    %vm144 = vcmp.eq.s32.totalorder %v140, 0
    %vm145 = vcmp.eq.s32.totalorder %v141, 0
    %v146 = vsel %vm144, 1, 0
    %v147 = vsel %vm145, 1, 0
    %v148 = vperm.slane %v146, 0
    %v149 = vperm.slane %v147, 0
    %vm150 = vcmp.eq.s32.totalorder %v148, 1
    %vm151 = vcmp.eq.s32.totalorder %v149, 1
    %v152 = vsel %vm150, %v57, 0.0
    %v153 = vsel %vm151, %v57, 0.0
    %v154 = vsel %vm150, %v107, 0.0
    %v155 = vsel %vm151, %v107, 0.0
    %vm156 = vcmp.eq.s32.totalorder %v140, 1
    %vm157 = vcmp.eq.s32.totalorder %v141, 1
    %v158 = vsel %vm156, 1, 0
    %v159 = vsel %vm157, 1, 0
    %v160 = vperm.slane %v158, 0
    %v161 = vperm.slane %v159, 0
    %vm162 = vcmp.eq.s32.totalorder %v160, 1
    %vm163 = vcmp.eq.s32.totalorder %v161, 1
    %v164 = vsel %vm162, %v58, %v152
    %v165 = vsel %vm163, %v58, %v153
    %v166 = vsel %vm162, %v119, %v154
    %v167 = vsel %vm163, %v119, %v155
    %v170 = vperm.slane %v142, 0
    %v171 = vperm.slane %v143, 0
    %v174 = vmul.f32 %v57, %v170
    %v175 = vmul.f32 %v58, %v171
    %v176 = vsub.f32 1.0, %v142
    %v177 = vsub.f32 1.0, %v143
    %v180 = vperm.slane %v176, 0
    %v181 = vperm.slane %v177, 0
    %v184 = vmul.f32 %v164, %v180
    %v185 = vmul.f32 %v165, %v181
    %v186 = vadd.f32 %v174, %v184
    %v187 = vadd.f32 %v175, %v185
    %v188 = vmul.f32 %v107, %v170
    %v189 = vmul.f32 %v119, %v171
    %v190 = vmul.f32 %v166, %v180
    %v191 = vmul.f32 %v167, %v181
    %v192 = vadd.f32 %v188, %v190
    %v193 = vadd.f32 %v189, %v191
    %v194 = vmul.f32 %v192, %v129
    %v195 = vmul.f32 %v193, %v139
    %v196 = vmul.f32 %v57, %v194
    %v197 = vmul.f32 %v58, %v195
    %v198 = vsub.f32 %v186, %v196
    %v199 = vsub.f32 %v187, %v197
    %201 = vset.pattern.permute.xlu0 0
    %202 = vperm.xlu0 %201, %v194
    %v203 = vpop.permute.xlu0 %202
    %205 = vset.pattern.permute.xlu0 0
    %206 = vperm.xlu0 %205, %v195
    %v207 = vpop.permute.xlu0 %206
    %v209 = vunpack.c.l.s4 839922192
    %v210 = vunpack.c.0.s8 %v209
    %v211 = vperm.slane %v203, %v210
    %v213 = vunpack.c.l.s4 839922192
    %v214 = vunpack.c.0.s8 %v213
    %v215 = vperm.slane %v207, %v214
    %v218 = vmul.f32 %v31, %v211
    %v219 = vmul.f32 %v32, %v215
    %221 = vset.pattern.permute.xlu0 0
    %222 = vperm.xlu0 %221, %v198
    %v223 = vpop.permute.xlu0 %222
    %225 = vset.pattern.permute.xlu0 0
    %226 = vperm.xlu0 %225, %v199
    %v227 = vpop.permute.xlu0 %226
    %v229 = vunpack.c.l.s4 839922192
    %v230 = vunpack.c.0.s8 %v229
    %v231 = vperm.slane %v223, %v230
    %v233 = vunpack.c.l.s4 839922192
    %v234 = vunpack.c.0.s8 %v233
    %v235 = vperm.slane %v227, %v234
    %v238 = vadd.f32 %v218, %v231
    %v239 = vadd.f32 %v219, %v235
    %240 = vst [vmem:[#allocation5] sm:$0xff] %v238
    %241 = vst [vmem:[#allocation5 + $0x8] sm:$0xff] %v239
    // Predicated region
    $region18: #{tpu_custom_call.1} parent=1 // pred_check
      _
    $region19: #{tpu_custom_call.1} parent=1 // pred_check_branch
      %243 = sbr.rel (0) target = $region21
    $region20: #{tpu_custom_call.1} parent=1 // pred_region
      %245 = vsyncadd [#allocation4], 0
      %s246 = sshll.u32 [#allocation5], 4
      %s247 = int_to_ptr.vmem [resolvable:$true] %s246
      %s248 = sshll.u32 %s3, 4
      %s249 = int_to_ptr.hbm [resolvable:$true] %s248
      %254 = dma.vmem_to_hbm [thread:$0]  %s247, 256, %s249, [#allocation4], 128, 128, 8
    $region21: #{tpu_custom_call.1} parent=1 // pred_fallthru
      _
    // Predicated region
    $region22: #{tpu_custom_call.1} parent=1 // pred_check
      _
    $region23: #{tpu_custom_call.1} parent=1 // pred_check_branch
      %256 = sbr.rel (0) target = $region25
    $region24: #{tpu_custom_call.1} parent=1 // pred_region
      %258 = dma.done [#allocation4], 256
    $region25: #{tpu_custom_call.1} parent=1 // pred_fallthru
      _
    %259 = vsyncpa [#allocation3], 1
    %260 = vsyncpa [#allocation4], 1

</llo_original>
